<compile_context>
chip_gen: v6e
topology: v6e:2x2x1
jax: 0.10.0
libtpu: 0.0.40
codegen_flags: <defaults>
</compile_context>

<pallas_src>
import functools
import math

import jax
import jax.numpy as jnp
from jax.experimental import pallas as pl
from jax.experimental.pallas import tpu as pltpu


def _label_smoothing_kernel(x_ref, tgt_ref, out_ref, *, padding_idx,
                            confidence, smooth_val, h_const, n_rows,
                            block_rows):
    """One grid step processes a (block_rows, V) tile of tokens."""
    i = pl.program_id(0)
    x = x_ref[...]                                   # (TN, V), native dtype
    tgt = tgt_ref[...]                               # (TN, 1), int32
    tn, v = x.shape

    # Target-column mask: one compare + one select per element (only VPU work).
    col = jax.lax.broadcasted_iota(jnp.int32, (1, v), 1)
    m = jnp.where(col == tgt, x, jnp.zeros((), x.dtype))          # (TN, V)

    # Row reductions on the MXU (idle otherwise): dots against ones vectors.
    # e zeroes the padding column; for rows with target != padding_idx,
    # m @ ones == x[r, t_r] and x @ e == rowsum(x[r]) - x[r, padding_idx].
    col_v = jax.lax.broadcasted_iota(jnp.int32, (v, 1), 0)
    e = jnp.where(col_v == padding_idx,
                  jnp.zeros((), x.dtype), jnp.ones((), x.dtype))  # (V, 1)
    ones_v = jnp.ones((v, 1), x.dtype)                            # (V, 1)

    sum_nopad = jnp.dot(x, e, preferred_element_type=jnp.float32)     # (TN, 1)
    sum_tgt = jnp.dot(m, ones_v, preferred_element_type=jnp.float32)  # (TN, 1)

    cross = (jnp.float32(smooth_val) * sum_nopad
             + jnp.float32(confidence - smooth_val) * sum_tgt)

    # Zero padded tokens and the (possibly garbage) rows of a ragged last block.
    row = jax.lax.broadcasted_iota(jnp.int32, (tn, 1), 0) + i * block_rows
    valid = (row < n_rows) & (tgt != jnp.int32(padding_idx))
    row_loss = jnp.where(valid, jnp.float32(h_const) - cross, jnp.float32(0.0))

    partial = jnp.sum(row_loss)                                   # scalar per block

    # Lane-dense unmasked store; only [0, 0, 0] carries the partial so the
    # wrapper can reduce with a plain dense jnp.sum over the whole output.
    sub = jax.lax.broadcasted_iota(jnp.int32, out_ref.shape, 1)
    lane = jax.lax.broadcasted_iota(jnp.int32, out_ref.shape, 2)
    out_ref[...] = jnp.where((sub == 0) & (lane == 0), partial, jnp.float32(0.0))


def _physical_vmem_bytes():
    """Best-effort physical VMEM query; conservative fallback (v7x per-TC)."""
    try:
        info = pltpu.get_tpu_info()
        for attr in ("vmem_capacity_bytes", "vmem_size_bytes", "vmem_bytes"):
            val = getattr(info, attr, None)
            if val:
                return int(val)
    except Exception:
        pass
    return 64 << 20


def label_smoothing_loss(x, target, *, size, padding_idx, smoothing,
                         block_rows=None):
    """Pallas equivalent of LabelSmoothing.forward(x, target) -> scalar loss."""
    n, v = x.shape
    assert v == size, "x.shape[1] must equal `size`"

    itemsize = jnp.dtype(x.dtype).itemsize
    row_bytes = v * itemsize

    # ---- Generation-aware VMEM budget: <= 3/4 of physical, capped at 64 MiB
    #      (v7x: 64 MiB/TC -> ~48 MiB budget; v5e/v6e: 128 MiB -> 64 MiB).
    vmem_budget = min(_physical_vmem_bytes() * 3 // 4, 64 << 20)

    out_tile_bytes = 8 * 128 * 4
    tgt_row_bytes = 128 * 4        # (block_rows, 1) int32 lane-pads to (block_rows, 128)
    slack = 4 << 20

    # ---- Tile sizing: ~16 MiB of x per grid step (amortizes ~0.35 us/step overhead),
    #      double-buffered footprint kept inside the VMEM budget, rows % 8 == 0.
    if block_rows is None:
        per_row_buffered = 2 * (row_bytes + tgt_row_bytes)
        rows_by_vmem = (vmem_budget - 2 * out_tile_bytes - slack) // max(per_row_buffered, 1)
        rows_by_bytes = (16 << 20) // max(row_bytes, 1)
        block_rows = min(rows_by_vmem, rows_by_bytes)
    block_rows = max(8, (int(block_rows) // 8) * 8)

    # Keep >= 2 blocks when there is enough work (both v7x TensorCores fed under
    # dimension_semantics=("parallel",)), and never a tile taller than ceil8(N).
    if n > 8:
        block_rows = min(block_rows, max(8, ((n + 15) // 16) * 8))
    block_rows = min(block_rows, max(8, ((n + 7) // 8) * 8))

    # No jnp.pad of x: the last block is ragged, handled by the in-kernel row mask.
    num_blocks = pl.cdiv(n, block_rows)

    tgt2d = target.astype(jnp.int32).reshape(n, 1)

    # ---- Trace-time constants (0*log(0) := 0, matching KLDivLoss semantics).
    confidence = 1.0 - smoothing
    smooth_val = smoothing / (size - 2)
    h_const = 0.0
    if confidence > 0.0:
        h_const += confidence * math.log(confidence)
    if smooth_val > 0.0:
        h_const += (size - 2) * smooth_val * math.log(smooth_val)

    kernel = functools.partial(
        _label_smoothing_kernel,
        padding_idx=padding_idx, confidence=confidence, smooth_val=smooth_val,
        h_const=h_const, n_rows=n, block_rows=block_rows)

    # ---- VMEM limit: double-buffered x + lane-padded target + output tiles + slack.
    x_tile_bytes = block_rows * row_bytes
    tgt_tile_bytes = block_rows * tgt_row_bytes
    needed = 2 * (x_tile_bytes + tgt_tile_bytes + out_tile_bytes) + slack
    vmem_limit = int(min(max(needed, 8 << 20), vmem_budget))

    partials = pl.pallas_call(
        kernel,
        out_shape=jax.ShapeDtypeStruct((num_blocks, 8, 128), jnp.float32),
        grid_spec=pltpu.PrefetchScalarGridSpec(
            num_scalar_prefetch=0,
            grid=(num_blocks,),
            in_specs=[
                pl.BlockSpec((block_rows, v), lambda i: (i, 0)),
                pl.BlockSpec((block_rows, 1), lambda i: (i, 0)),
            ],
            out_specs=pl.BlockSpec((1, 8, 128), lambda i: (i, 0, 0)),
        ),
        compiler_params=pltpu.CompilerParams(
            dimension_semantics=("parallel",),
            vmem_limit_bytes=vmem_limit),
    )(x, tgt2d)

    # Only [i, 0, 0] is nonzero per block: plain dense sum, no strided gather.
    return jnp.sum(partials)


def _reference_loss(x, target, *, size, padding_idx, smoothing):
    """Pure-JAX reference mirroring the PyTorch forward."""
    n, v = x.shape
    confidence = 1.0 - smoothing
    smooth_val = smoothing / (size - 2)
    col = jnp.arange(v)[None, :]
    tgt = target.reshape(n, 1)
    td = jnp.where(col == tgt, confidence, smooth_val).astype(jnp.float32)
    td = jnp.where(col == padding_idx, 0.0, td)
    td = jnp.where(tgt == padding_idx, 0.0, td)
    log_t = jnp.where(td > 0.0, jnp.log(jnp.where(td > 0.0, td, 1.0)), 0.0)
    return jnp.sum(td * (log_t - x.astype(jnp.float32)))


if __name__ == "__main__":
    # Synthetic config: vocab size 32, padding index 0, smoothing 0.1,
    # batch of 8 tokens (e.g. batch=2 x seq=4 flattened).
    SIZE = 32
    PADDING_IDX = 0
    SMOOTHING = 0.1
    N_TOKENS = 8

    key = jax.random.PRNGKey(0)
    k_logits, k_tgt = jax.random.split(key)

    logits = jax.random.normal(k_logits, (N_TOKENS, SIZE), dtype=jnp.float32)
    x = jax.nn.log_softmax(logits, axis=-1)  # module expects log-probabilities
    target = jax.random.randint(k_tgt, (N_TOKENS,), 0, SIZE, dtype=jnp.int32)
    # Force a couple of padded positions so the row-zeroing path is exercised.
    target = target.at[1].set(PADDING_IDX).at[5].set(PADDING_IDX)

    loss = label_smoothing_loss(
        x, target, size=SIZE, padding_idx=PADDING_IDX, smoothing=SMOOTHING)
    loss = jax.block_until_ready(loss)

    ref = _reference_loss(
        x, target, size=SIZE, padding_idx=PADDING_IDX, smoothing=SMOOTHING)
    # Tolerance leaves headroom for MXU f32 matmul pass precision.
    assert jnp.allclose(loss, ref, rtol=5e-3, atol=5e-3), (loss, ref)

    print("KERNEL_OK")
</pallas_src>

<mosaic_0001>
module attributes {stable_mosaic.version = 11 : i64} {
  func.func @_label_smoothing_kernel(%arg0: i32, %arg1: memref<8x32xf32, #tpu.memory_space<vmem>>, %arg2: memref<8x1xi32, #tpu.memory_space<vmem>>, %arg3: memref<1x8x128xf32, #tpu.memory_space<vmem>>) attributes {dimension_semantics = [#tpu.dimension_semantics<parallel>], iteration_bounds = array<i64: 1>, scalar_prefetch = 0 : i64, scratch_operands = 0 : i64, tpu.core_type = #tpu.core_type<tc>, window_params = [{transform_indices = @transform_0, window_bounds = array<i64: 8, 32>}, {transform_indices = @transform_1, window_bounds = array<i64: 8, 1>}, {transform_indices = @transform_2, window_bounds = array<i64: 1, 8, 128>}]} {
    %c0 = arith.constant 0 : index
    %c0_0 = arith.constant 0 : index
    %0 = vector.load %arg1[%c0, %c0_0] : memref<8x32xf32, #tpu.memory_space<vmem>>, vector<8x32xf32>
    %c0_1 = arith.constant 0 : index
    %c0_2 = arith.constant 0 : index
    %1 = vector.load %arg2[%c0_1, %c0_2] : memref<8x1xi32, #tpu.memory_space<vmem>>, vector<8x1xi32>
    %2 = tpu.iota {dimensions = array<i32: 1>} : vector<1x32xi32>
    %3 = vector.broadcast %2 : vector<1x32xi32> to vector<8x32xi32>
    %4 = vector.broadcast %1 : vector<8x1xi32> to vector<8x32xi32>
    %5 = arith.cmpi eq, %3, %4 : vector<8x32xi32>
    %cst = arith.constant 0.000000e+00 : f32
    %6 = vector.broadcast %cst : f32 to vector<8x32xf32>
    %7 = arith.select %5, %0, %6 : vector<8x32xi1>, vector<8x32xf32>
    %8 = tpu.iota {dimensions = array<i32: 0>} : vector<32x1xi32>
    %c0_i32 = arith.constant 0 : i32
    %9 = vector.broadcast %c0_i32 : i32 to vector<32x1xi32>
    %10 = arith.cmpi eq, %8, %9 : vector<32x1xi32>
    %cst_3 = arith.constant 0.000000e+00 : f32
    %cst_4 = arith.constant 1.000000e+00 : f32
    %11 = vector.broadcast %cst_3 : f32 to vector<32x1xf32>
    %12 = vector.broadcast %cst_4 : f32 to vector<32x1xf32>
    %13 = arith.select %10, %11, %12 : vector<32x1xi1>, vector<32x1xf32>
    %cst_5 = arith.constant 1.000000e+00 : f32
    %14 = vector.broadcast %cst_5 : f32 to vector<32x1xf32>
    %cst_6 = arith.constant dense<0.000000e+00> : vector<8x1xf32>
    %15 = tpu.matmul %0, %13, %cst_6 {dimension_numbers = #tpu.dot_dimension_numbers<[1], [0], [0], [1], [0, 0, 1, 1], [], []>} : vector<8x32xf32>, vector<32x1xf32>, vector<8x1xf32> -> vector<8x1xf32>
    %cst_7 = arith.constant dense<0.000000e+00> : vector<8x1xf32>
    %16 = tpu.matmul %7, %14, %cst_7 {dimension_numbers = #tpu.dot_dimension_numbers<[1], [0], [0], [1], [0, 0, 1, 1], [], []>} : vector<8x32xf32>, vector<32x1xf32>, vector<8x1xf32> -> vector<8x1xf32>
    %cst_8 = arith.constant 0.00333333341 : f32
    %17 = vector.broadcast %cst_8 : f32 to vector<8x1xf32>
    %18 = arith.mulf %17, %15 : vector<8x1xf32>
    %cst_9 = arith.constant 0.896666646 : f32
    %19 = vector.broadcast %cst_9 : f32 to vector<8x1xf32>
    %20 = arith.mulf %19, %16 : vector<8x1xf32>
    %21 = arith.addf %18, %20 : vector<8x1xf32>
    %22 = tpu.iota {dimensions = array<i32: 0>} : vector<8x1xi32>
    %c8_i32 = arith.constant 8 : i32
    %23 = arith.muli %arg0, %c8_i32 : i32
    %24 = vector.broadcast %23 : i32 to vector<8x1xi32>
    %25 = arith.addi %22, %24 : vector<8x1xi32>
    %c8_i32_10 = arith.constant 8 : i32
    %26 = vector.broadcast %c8_i32_10 : i32 to vector<8x1xi32>
    %27 = arith.cmpi slt, %25, %26 : vector<8x1xi32>
    %c0_i32_11 = arith.constant 0 : i32
    %28 = vector.broadcast %c0_i32_11 : i32 to vector<8x1xi32>
    %29 = arith.cmpi ne, %1, %28 : vector<8x1xi32>
    %30 = arith.andi %27, %29 : vector<8x1xi1>
    %cst_12 = arith.constant -0.665202737 : f32
    %31 = vector.broadcast %cst_12 : f32 to vector<8x1xf32>
    %32 = arith.subf %31, %21 : vector<8x1xf32>
    %cst_13 = arith.constant 0.000000e+00 : f32
    %33 = vector.broadcast %cst_13 : f32 to vector<8x1xf32>
    %34 = arith.select %30, %32, %33 : vector<8x1xi1>, vector<8x1xf32>
    %35 = vector.shape_cast %34 : vector<8x1xf32> to vector<1x8x1xf32>
    %cst_14 = arith.constant dense<0.000000e+00> : vector<1xf32>
    %36 = vector.multi_reduction <add>, %35, %cst_14 [1, 2] : vector<1x8x1xf32> to vector<1xf32>
    %37 = vector.shape_cast %36 : vector<1xf32> to vector<1x1x1xf32>
    %38 = vector.extract %37[0, 0, 0] : f32 from vector<1x1x1xf32>
    %39 = tpu.iota {dimensions = array<i32: 1>} : vector<1x8x128xi32>
    %40 = tpu.iota {dimensions = array<i32: 2>} : vector<1x8x128xi32>
    %c0_i32_15 = arith.constant 0 : i32
    %41 = vector.broadcast %c0_i32_15 : i32 to vector<1x8x128xi32>
    %42 = arith.cmpi eq, %39, %41 : vector<1x8x128xi32>
    %c0_i32_16 = arith.constant 0 : i32
    %43 = vector.broadcast %c0_i32_16 : i32 to vector<1x8x128xi32>
    %44 = arith.cmpi eq, %40, %43 : vector<1x8x128xi32>
    %45 = arith.andi %42, %44 : vector<1x8x128xi1>
    %cst_17 = arith.constant 0.000000e+00 : f32
    %46 = vector.broadcast %38 : f32 to vector<1x8x128xf32>
    %47 = vector.broadcast %cst_17 : f32 to vector<1x8x128xf32>
    %48 = arith.select %45, %46, %47 : vector<1x8x128xi1>, vector<1x8x128xf32>
    %c0_18 = arith.constant 0 : index
    %c0_19 = arith.constant 0 : index
    %c0_20 = arith.constant 0 : index
    %49 = vector.load %arg3[%c0_18, %c0_19, %c0_20] : memref<1x8x128xf32, #tpu.memory_space<vmem>>, vector<1x8x128xf32>
    tpu.vector_store %arg3[%c0_18, %c0_19, %c0_20], %48 {strides = array<i32>} : memref<1x8x128xf32, #tpu.memory_space<vmem>>, vector<1x8x128xf32>,
    return
  }
  func.func @transform_0(%arg0: i32) -> (i32, i32) {
    %c0_i32 = arith.constant 0 : i32
    %c0_i32_0 = arith.constant 0 : i32
    return %arg0, %c0_i32 : i32, i32
  }
  func.func @transform_1(%arg0: i32) -> (i32, i32) {
    %c0_i32 = arith.constant 0 : i32
    %c0_i32_0 = arith.constant 0 : i32
    return %arg0, %c0_i32 : i32, i32
  }
  func.func @transform_2(%arg0: i32) -> (i32, i32, i32) {
    %c0_i32 = arith.constant 0 : i32
    %c0_i32_0 = arith.constant 0 : i32
    %c0_i32_1 = arith.constant 0 : i32
    return %arg0, %c0_i32, %c0_i32_0 : i32, i32, i32
  }
}

</mosaic_0001>

<llo_original>
// kernel: tpu_custom_call.1
$region0: #{tpu_custom_call.1}
  #allocation0 [shape = 'u32[]', space=smem, size = 0x4, offset = 0x4, fixed_abs, tag = 'smem constant byte address 0x4 - core index']
  #allocation1 [shape = 'u32[144,128]{1,0:T(1,128)}', space=vmem, size = 0x12000, scoped, tag = 'internal scratch']
  %s0 = inlined_call_operand.vmem [shape: f32[8,32], index: 0, kind: input, shape index: {}]
  %s1 = inlined_call_operand.vmem [shape: s32[8,1], index: 1, kind: input, shape index: {}]
  %s2 = inlined_call_operand.hbm [shape: f32[1,8,128], index: 2, kind: output, shape index: {}]
  %s3 = sld [smem:[#allocation0]]
  $region18: #{tpu_custom_call.1} parent=0
    _
  %s5 = ssub.s32 1, %s3
  %s6 = scalar_select 0, %s5, %s3
  $region1: #{tpu_custom_call.1} parent=0
    #allocation2 [shape = 'u8[4096]{0}', space=vmem, size = 0x1000, scoped, tag = 'output window, operand 0, single buffered']
    #allocation3 [shape = 's32[1]{0}', space=sflag, size = 0x4, scoped, tag = 'scoped memory for tpu_custom_call.1']
    %7 = vsyncpa [#allocation3], 0
    // Predicated region
    $region2: #{tpu_custom_call.1} parent=1 // pred_check
      _
    $region3: #{tpu_custom_call.1} parent=1 // pred_check_branch
      %9 = sbr.rel (0) target = $region5
    $region4: #{tpu_custom_call.1} parent=1 // pred_region
      _
    $region5: #{tpu_custom_call.1} parent=1 // pred_fallthru
      _
    // Predicated region
    $region6: #{tpu_custom_call.1} parent=1 // pred_check
      _
    $region7: #{tpu_custom_call.1} parent=1 // pred_check_branch
      %11 = sbr.rel (0) target = $region9
    $region8: #{tpu_custom_call.1} parent=1 // pred_region
      _
    $region9: #{tpu_custom_call.1} parent=1 // pred_fallthru
      _
    %v12 = vld [vmem:[%s0] sm:$0xff]
    %v13 = vld [vmem:[%s1] sm:$0xff]
    %v14 = vlaneseq
    %v15 = vand.u32 %v14, 127
    %16 = vset.pattern.permute.xlu0 0
    %17 = vperm.xlu0 %16, %v13
    %v18 = vpop.permute.xlu0 %17
    %vm19 = vcmp.eq.s32.totalorder %v15, %v18
    %v20 = vsel %vm19, %v12, 0.0
    %v21 = vlaneseq
    %v22 = vshrl.u32 %v21, 7
    %v23 = vadd.s32 %v22, 8
    %v24 = vadd.s32 %v22, 16
    %v25 = vadd.s32 %v22, 24
    %vm26 = vcmp.eq.s32.totalorder %v22, 0
    %vm27 = vcmp.eq.s32.totalorder %v23, 0
    %vm28 = vcmp.eq.s32.totalorder %v24, 0
    %vm29 = vcmp.eq.s32.totalorder %v25, 0
    %v30 = vsel %vm26, 0.0, 1.0
    %v31 = vsel %vm27, 0.0, 1.0
    %v32 = vsel %vm28, 0.0, 1.0
    %v33 = vsel %vm29, 0.0, 1.0
    %vm34 = vcmask 261120
    %v36 = vsel %vm34, %v12, 0
    %38 = vmatprep.subr.mxu0 0.0
    %39 = vmatpush1.msra.mxu0 0.0
    %40 = vmatprep.subr.mxu0 0.0
    %41 = vmatpush1.msra.mxu0 0.0
    %42 = vmatprep.subr.mxu0 0.0
    %43 = vmatpush1.msra.mxu0 0.0
    %44 = vmatprep.subr.mxu0 0.0
    %45 = vmatpush1.msra.mxu0 0.0
    %46 = vmatprep.subr.mxu0 0.0
    %47 = vmatpush1.msra.mxu0 0.0
    %48 = vmatprep.subr.mxu0 0.0
    %49 = vmatpush1.msra.mxu0 0.0
    %50 = vmatprep.subr.mxu0 0.0
    %51 = vmatpush1.msra.mxu0 0.0
    %52 = vmatprep.subr.mxu0 0.0
    %53 = vmatpush1.msra.mxu0 0.0
    %54 = vmatprep.subr.mxu0 0.0
    %55 = vmatpush1.msra.mxu0 0.0
    %56 = vmatprep.subr.mxu0 0.0
    %57 = vmatpush1.msra.mxu0 0.0
    %58 = vmatprep.subr.mxu0 0.0
    %59 = vmatpush1.msra.mxu0 0.0
    %60 = vmatprep.subr.mxu0 0.0
    %61 = vmatpush1.msra.mxu0 0.0
    %62 = vmatprep.subr.mxu0 0.0
    %63 = vmatpush1.msra.mxu0 %v33
    %64 = vmatprep.subr.mxu0 0.0
    %65 = vmatpush1.msra.mxu0 %v32
    %66 = vmatprep.subr.mxu0 0.0
    %67 = vmatpush1.msra.mxu0 %v31
    %68 = vmatprep.subr.mxu0 0.0
    %69 = vmatpush1.msra.mxu0 %v30
    %70 = vmatprep.subr.mxu0 0.0
    %71 = vmatpush2.msra.mxu0 0.0
    %72 = vmatprep.subr.mxu0 0.0
    %73 = vmatpush2.msra.mxu0 0.0
    %74 = vmatprep.subr.mxu0 0.0
    %75 = vmatpush2.msra.mxu0 0.0
    %76 = vmatprep.subr.mxu0 0.0
    %77 = vmatpush2.msra.mxu0 0.0
    %78 = vmatprep.subr.mxu0 0.0
    %79 = vmatpush2.msra.mxu0 0.0
    %80 = vmatprep.subr.mxu0 0.0
    %81 = vmatpush2.msra.mxu0 0.0
    %82 = vmatprep.subr.mxu0 0.0
    %83 = vmatpush2.msra.mxu0 0.0
    %84 = vmatprep.subr.mxu0 0.0
    %85 = vmatpush2.msra.mxu0 0.0
    %86 = vmatprep.subr.mxu0 0.0
    %87 = vmatpush2.msra.mxu0 0.0
    %88 = vmatprep.subr.mxu0 0.0
    %89 = vmatpush2.msra.mxu0 0.0
    %90 = vmatprep.subr.mxu0 0.0
    %91 = vmatpush2.msra.mxu0 0.0
    %92 = vmatprep.subr.mxu0 0.0
    %93 = vmatpush2.msra.mxu0 0.0
    %94 = vmatprep.subr.mxu0 0.0
    %95 = vmatpush2.msra.mxu0 0.0
    %96 = vmatprep.subr.mxu0 0.0
    %97 = vmatpush2.msra.mxu0 0.0
    %98 = vmatprep.subr.mxu0 0.0
    %99 = vmatpush2.msra.mxu0 0.0
    %100 = vmatprep.subr.mxu0 0.0
    %101 = vmatpush2.msra.mxu0 0.0
    %102 = vmatprep.mubr.f32.mxu0 0.0
    %103 = vmatmul.mubr.f32.gmra.mxu0 %v36
    %v104 = vpop.f32.mrf.mxu0
    %v105 = vadd.f32 0.0, %v104
    %v106 = vpop.f32.mrf.mxu0
    %107 = vdwg.mxu0
    %v109 = vsel %vm34, %v20, 0
    %111 = vmatprep.subr.mxu0 0.0
    %112 = vmatpush1.msra.mxu0 0.0
    %113 = vmatprep.subr.mxu0 0.0
    %114 = vmatpush1.msra.mxu0 0.0
    %115 = vmatprep.subr.mxu0 0.0
    %116 = vmatpush1.msra.mxu0 0.0
    %117 = vmatprep.subr.mxu0 0.0
    %118 = vmatpush1.msra.mxu0 0.0
    %119 = vmatprep.subr.mxu0 0.0
    %120 = vmatpush1.msra.mxu0 0.0
    %121 = vmatprep.subr.mxu0 0.0
    %122 = vmatpush1.msra.mxu0 0.0
    %123 = vmatprep.subr.mxu0 0.0
    %124 = vmatpush1.msra.mxu0 0.0
    %125 = vmatprep.subr.mxu0 0.0
    %126 = vmatpush1.msra.mxu0 0.0
    %127 = vmatprep.subr.mxu0 0.0
    %128 = vmatpush1.msra.mxu0 0.0
    %129 = vmatprep.subr.mxu0 0.0
    %130 = vmatpush1.msra.mxu0 0.0
    %131 = vmatprep.subr.mxu0 0.0
    %132 = vmatpush1.msra.mxu0 0.0
    %133 = vmatprep.subr.mxu0 0.0
    %134 = vmatpush1.msra.mxu0 0.0
    %135 = vmatprep.subr.mxu0 0.0
    %136 = vmatpush1.msra.mxu0 1.0
    %137 = vmatprep.subr.mxu0 0.0
    %138 = vmatpush1.msra.mxu0 1.0
    %139 = vmatprep.subr.mxu0 0.0
    %140 = vmatpush1.msra.mxu0 1.0
    %141 = vmatprep.subr.mxu0 0.0
    %142 = vmatpush1.msra.mxu0 1.0
    %143 = vmatprep.subr.mxu0 0.0
    %144 = vmatpush2.msra.mxu0 0.0
    %145 = vmatprep.subr.mxu0 0.0
    %146 = vmatpush2.msra.mxu0 0.0
    %147 = vmatprep.subr.mxu0 0.0
    %148 = vmatpush2.msra.mxu0 0.0
    %149 = vmatprep.subr.mxu0 0.0
    %150 = vmatpush2.msra.mxu0 0.0
    %151 = vmatprep.subr.mxu0 0.0
    %152 = vmatpush2.msra.mxu0 0.0
    %153 = vmatprep.subr.mxu0 0.0
    %154 = vmatpush2.msra.mxu0 0.0
    %155 = vmatprep.subr.mxu0 0.0
    %156 = vmatpush2.msra.mxu0 0.0
    %157 = vmatprep.subr.mxu0 0.0
    %158 = vmatpush2.msra.mxu0 0.0
    %159 = vmatprep.subr.mxu0 0.0
    %160 = vmatpush2.msra.mxu0 0.0
    %161 = vmatprep.subr.mxu0 0.0
    %162 = vmatpush2.msra.mxu0 0.0
    %163 = vmatprep.subr.mxu0 0.0
    %164 = vmatpush2.msra.mxu0 0.0
    %165 = vmatprep.subr.mxu0 0.0
    %166 = vmatpush2.msra.mxu0 0.0
    %167 = vmatprep.subr.mxu0 0.0
    %168 = vmatpush2.msra.mxu0 0.0
    %169 = vmatprep.subr.mxu0 0.0
    %170 = vmatpush2.msra.mxu0 0.0
    %171 = vmatprep.subr.mxu0 0.0
    %172 = vmatpush2.msra.mxu0 0.0
    %173 = vmatprep.subr.mxu0 0.0
    %174 = vmatpush2.msra.mxu0 0.0
    %175 = vmatprep.mubr.f32.mxu0 0.0
    %176 = vmatmul.mubr.f32.gmra.mxu0 %v109
    %v177 = vpop.f32.mrf.mxu0
    %v178 = vadd.f32 0.0, %v177
    %v179 = vpop.f32.mrf.mxu0
    %180 = vdwg.mxu0
    %v181 = vmul.f32 %v105, 0.0033333334
    %v182 = vmul.f32 %v178, 0.89666665
    %v183 = vadd.f32 %v181, %v182
    %s184 = smul.u32 0, 8
    %v185 = vstv %s184
    %v186 = vadd.s32 %v22, %v185
    %vm187 = vcmp.lt.s32.totalorder %v186, 8
    %vm188 = vcmp.ne.s32.totalorder %v13, 0
    %vm189 = vmand %vm187, %vm188
    %v190 = vsub.f32 -0.66520274, %v183
    %v191 = vsel %vm189, %v190, 0.0
    %vm192 = vcmask 7168
    %v193 = vsel %vm192, %v191, 0.0
    %194 = vadd.xlane.f32.xlu0 %v193
    %v195 = vpop.xlane.xlu0 %194
    %v196 = vrot.slane %v195, 4
    %v197 = vadd.f32 %v195, %v196
    %v198 = vrot.slane %v197, 2
    %v199 = vadd.f32 %v197, %v198
    %v200 = vrot.slane %v199, 1
    %v201 = vadd.f32 %v199, %v200
    %s202 = vtos %v201
    %vm203 = vcmp.eq.s32.totalorder %v15, 0
    %vm204 = vmand %vm26, %vm203
    %v205 = vstv %s202
    %v206 = vsel %vm204, %v205, 0.0
    %207 = vst [vmem:[#allocation2] sm:$0xff] %v206
    // Predicated region
    $region10: #{tpu_custom_call.1} parent=1 // pred_check
      _
    $region11: #{tpu_custom_call.1} parent=1 // pred_check_branch
      %209 = sbr.rel (0) target = $region13
    $region12: #{tpu_custom_call.1} parent=1 // pred_region
      %s211 = ssub.s32 128, 128
      %212 = vsyncadd [#allocation3], %s211
      %s214 = sshll.u32 [#allocation2], 4
      %s215 = int_to_ptr.vmem [resolvable:$true] %s214
      %217 = dma.vmem_to_hbm [thread:$0]  %s215, 128, %s2, [#allocation3]
    $region13: #{tpu_custom_call.1} parent=1 // pred_fallthru
      _
    // Predicated region
    $region14: #{tpu_custom_call.1} parent=1 // pred_check
      _
    $region15: #{tpu_custom_call.1} parent=1 // pred_check_branch
      %219 = sbr.rel (0) target = $region17
    $region16: #{tpu_custom_call.1} parent=1 // pred_region
      %220 = dma.done [#allocation3], 128
    $region17: #{tpu_custom_call.1} parent=1 // pred_fallthru
      _
    %221 = vsyncpa [#allocation3], 1

</llo_original>
